<compile_context>
chip_gen: v7x
topology: tpu7x:2x2x1
jax: 0.10.0
libtpu: 0.0.40
codegen_flags: <defaults>
</compile_context>

<pallas_src>
import jax
import jax.numpy as jnp
from jax.experimental import pallas as pl
from jax.experimental.pallas import tpu as pltpu


def _make_rule_kernel(n):
    """Kernel over n input refs + 1 output ref: streaming elementwise product."""

    def kernel(*refs):
        o_ref = refs[n]
        acc = refs[0][...]
        for k in range(1, n):
            acc = acc * refs[k][...]
        o_ref[...] = acc

    return kernel


def _jnp_product(xs):
    prod = xs[0]
    for x in xs[1:]:
        prod = prod * x
    return prod


def rule_layer(xs, *, min_pallas_bytes=1 << 20):
    """Elementwise product of a list of identically-shaped arrays (Pallas TPU)."""
    assert len(xs) >= 1
    shape = xs[0].shape
    dtype = xs[0].dtype
    for x in xs:
        assert x.shape == shape, "RuleLayer: all inputs must share the same shape"
        assert x.dtype == dtype, "RuleLayer: all inputs must share the same dtype"
    n = len(xs)

    # product = ones_like(x[0]) * x[0] == x[0]
    if n == 1:
        return xs[0]

    lane = 128
    itemsize = jnp.dtype(dtype).itemsize
    # Packed sublane count: 8 for 32-bit, 16 for bf16, 32 for int8/fp8.
    sub = max(8, 32 // itemsize)

    total = 1
    for d in shape:
        total *= d

    # Small-input bypass: the fused XLA multiply beats a pallas_call launch.
    if (n + 1) * total * itemsize < min_pallas_bytes:
        return _jnp_product(xs)

    # Lane-only padding granularity: kernel handles the first `main` elements as a
    # lane-dense (rows, 128) slab; the <128-element tail (rare) is computed in jnp.
    main = (total // lane) * lane
    tail = total - main
    rows = main // lane
    if rows == 0:  # whole tensor smaller than one lane row
        return _jnp_product(xs)

    flats = []
    for x in xs:
        f = jnp.ravel(x)
        if tail:
            f = f[:main]
        flats.append(f.reshape(rows, lane))

    # VMEM-budgeted, byte-targeted row tile (generation aware).
    try:
        vmem_cap = int(pltpu.get_tpu_info().vmem_capacity_bytes)
    except Exception:  # conservative fallback (v7x per-TC VMEM)
        vmem_cap = 64 * 1024 * 1024
    block_budget = int(vmem_cap * 0.4)
    # Double-buffered (n inputs + 1 output) blocks of (tr, 128) elements.
    tr_budget = block_budget // (2 * (n + 1) * lane * itemsize)
    # ~4 MiB per ref per block: tiled-streaming measurements plateau at 2-4 MiB.
    tr_target = (4 * 1024 * 1024) // (lane * itemsize)

    if rows <= sub:
        tr = rows  # block equals full array dim -> always a legal block shape
    else:
        tr = min(tr_target, tr_budget, rows)
        # Keep >= 4 grid steps when rows permit: v7x has 2 TensorCores sharing the
        # grid, and extra steps are nearly free at multi-MiB tiles on 1-TC chips.
        min_steps = 4
        if rows > min_steps * sub:
            tr = min(tr, (rows + min_steps - 1) // min_steps)
        tr = max(sub, (tr // sub) * sub)
    grid = ((rows + tr - 1) // tr,)

    block_bytes = 2 * (n + 1) * tr * lane * itemsize
    vmem_limit = min(
        int(vmem_cap * 0.85),
        max(32 * 1024 * 1024, block_bytes + (8 << 20)),
    )

    kernel = _make_rule_kernel(n)
    out2d = pl.pallas_call(
        kernel,
        out_shape=jax.ShapeDtypeStruct((rows, lane), dtype),
        grid_spec=pltpu.PrefetchScalarGridSpec(
            num_scalar_prefetch=0,
            grid=grid,
            in_specs=[pl.BlockSpec((tr, lane), lambda i: (i, 0)) for _ in range(n)],
            out_specs=pl.BlockSpec((tr, lane), lambda i: (i, 0)),
        ),
        compiler_params=pltpu.CompilerParams(
            dimension_semantics=("parallel",),
            vmem_limit_bytes=vmem_limit,
        ),
        cost_estimate=pl.CostEstimate(
            flops=(n - 1) * main,
            transcendentals=0,
            bytes_accessed=(n + 1) * main * itemsize,
        ),
    )(*flats)

    out_flat = out2d.reshape(-1)
    if tail:
        tail_prod = _jnp_product([jnp.ravel(x)[main:] for x in xs])
        out_flat = jnp.concatenate([out_flat, tail_prod])
    return out_flat.reshape(shape)


if __name__ == "__main__":
    def ref_product(xs):
        r = jnp.ones_like(xs[0])
        for x in xs:
            r = r * x
        return r

    # Test 1: small NCHW feature maps (lane-aligned total), force the Pallas path.
    key = jax.random.PRNGKey(0)
    shapes = [(2, 4, 16, 16)] * 3
    keys = jax.random.split(key, len(shapes))
    xs = [jax.random.normal(k, s, dtype=jnp.float32) for k, s in zip(keys, shapes)]
    out = jax.block_until_ready(rule_layer(xs, min_pallas_bytes=0))
    assert out.shape == xs[0].shape
    assert jnp.allclose(out, ref_product(xs), atol=1e-6, rtol=1e-6)

    # Test 2: ragged total (315 elements, not a multiple of 128) -> kernel main + jnp tail.
    keys2 = jax.random.split(jax.random.PRNGKey(0), 2)
    ys = [jax.random.normal(k, (5, 7, 9), dtype=jnp.float32) for k in keys2]
    out2 = jax.block_until_ready(rule_layer(ys, min_pallas_bytes=0))
    assert jnp.allclose(out2, ref_product(ys), atol=1e-6, rtol=1e-6)

    # Test 3: larger input taking the default (non-bypassed) Pallas path.
    keys3 = jax.random.split(jax.random.PRNGKey(0), 3)
    zs = [jax.random.normal(k, (4, 8, 64, 64), dtype=jnp.float32) for k in keys3]
    out3 = jax.block_until_ready(rule_layer(zs))
    assert jnp.allclose(out3, ref_product(zs), atol=1e-6, rtol=1e-6)

    print("KERNEL_OK")
</pallas_src>

<mosaic_0001>
module attributes {stable_mosaic.version = 11 : i64} {
  func.func @kernel(%arg0: i32, %arg1: memref<16x128xf32, #tpu.memory_space<vmem>>, %arg2: memref<16x128xf32, #tpu.memory_space<vmem>>, %arg3: memref<16x128xf32, #tpu.memory_space<vmem>>, %arg4: memref<16x128xf32, #tpu.memory_space<vmem>>) attributes {dimension_semantics = [#tpu.dimension_semantics<parallel>], iteration_bounds = array<i64: 1>, scalar_prefetch = 0 : i64, scratch_operands = 0 : i64, tpu.core_type = #tpu.core_type<tc>, window_params = [{transform_indices = @transform_0, window_bounds = array<i64: 16, 128>}, {transform_indices = @transform_1, window_bounds = array<i64: 16, 128>}, {transform_indices = @transform_2, window_bounds = array<i64: 16, 128>}, {transform_indices = @transform_3, window_bounds = array<i64: 16, 128>}]} {
    %c0 = arith.constant 0 : index
    %c0_0 = arith.constant 0 : index
    %0 = vector.load %arg1[%c0, %c0_0] : memref<16x128xf32, #tpu.memory_space<vmem>>, vector<16x128xf32>
    %c0_1 = arith.constant 0 : index
    %c0_2 = arith.constant 0 : index
    %1 = vector.load %arg2[%c0_1, %c0_2] : memref<16x128xf32, #tpu.memory_space<vmem>>, vector<16x128xf32>
    %2 = arith.mulf %0, %1 : vector<16x128xf32>
    %c0_3 = arith.constant 0 : index
    %c0_4 = arith.constant 0 : index
    %3 = vector.load %arg3[%c0_3, %c0_4] : memref<16x128xf32, #tpu.memory_space<vmem>>, vector<16x128xf32>
    %4 = arith.mulf %2, %3 : vector<16x128xf32>
    %c0_5 = arith.constant 0 : index
    %c0_6 = arith.constant 0 : index
    %5 = vector.load %arg4[%c0_5, %c0_6] : memref<16x128xf32, #tpu.memory_space<vmem>>, vector<16x128xf32>
    tpu.vector_store %arg4[%c0_5, %c0_6], %4 {strides = array<i32>} : memref<16x128xf32, #tpu.memory_space<vmem>>, vector<16x128xf32>,
    return
  }
  func.func @transform_0(%arg0: i32) -> (i32, i32) {
    %c0_i32 = arith.constant 0 : i32
    %c0_i32_0 = arith.constant 0 : i32
    return %arg0, %c0_i32 : i32, i32
  }
  func.func @transform_1(%arg0: i32) -> (i32, i32) {
    %c0_i32 = arith.constant 0 : i32
    %c0_i32_0 = arith.constant 0 : i32
    return %arg0, %c0_i32 : i32, i32
  }
  func.func @transform_2(%arg0: i32) -> (i32, i32) {
    %c0_i32 = arith.constant 0 : i32
    %c0_i32_0 = arith.constant 0 : i32
    return %arg0, %c0_i32 : i32, i32
  }
  func.func @transform_3(%arg0: i32) -> (i32, i32) {
    %c0_i32 = arith.constant 0 : i32
    %c0_i32_0 = arith.constant 0 : i32
    return %arg0, %c0_i32 : i32, i32
  }
}

</mosaic_0001>

<llo_original>
// kernel: tpu_custom_call.1
$region0: #{tpu_custom_call.1}
  #allocation0 [shape = 'u32[]', space=smem, size = 0x4, offset = 0x4, fixed_abs, tag = 'smem constant byte address 0x4 - core index']
  #allocation1 [shape = 'u32[144,128]{1,0:T(1,128)}', space=vmem, size = 0x12000, scoped, tag = 'internal scratch']
  %s0 = inlined_call_operand.hbm [shape: f32[16,128], index: 0, kind: input, shape index: {}]
  %s1 = inlined_call_operand.hbm [shape: f32[16,128], index: 1, kind: input, shape index: {}]
  %s2 = inlined_call_operand.hbm [shape: f32[16,128], index: 2, kind: input, shape index: {}]
  %s3 = inlined_call_operand.hbm [shape: f32[16,128], index: 3, kind: output, shape index: {}]
  %s4 = sld [smem:[#allocation0]]
  $region34: #{tpu_custom_call.1} parent=0
    _
  %s6 = ssub.s32 1, %s4
  %s7 = scalar_select 0, %s6, %s4
  $region1: #{tpu_custom_call.1} parent=0
    #allocation2 [shape = 'u8[8192]{0}', space=vmem, size = 0x2000, scoped, tag = 'input window, operand 0, single buffered']
    #allocation3 [shape = 's32[1]{0}', space=sflag, size = 0x4, scoped, tag = 'scoped memory for tpu_custom_call.1']
    #allocation4 [shape = 's32[1]{0}', space=sflag, size = 0x4, scoped, tag = 'scoped memory for tpu_custom_call.1']
    #allocation5 [shape = 'u8[8192]{0}', space=vmem, size = 0x2000, scoped, tag = 'input window, operand 1, single buffered']
    #allocation6 [shape = 's32[1]{0}', space=sflag, size = 0x4, scoped, tag = 'scoped memory for tpu_custom_call.1']
    #allocation7 [shape = 'u8[8192]{0}', space=vmem, size = 0x2000, scoped, tag = 'input window, operand 2, single buffered']
    #allocation8 [shape = 'u8[8192]{0}', space=vmem, size = 0x2000, scoped, tag = 'output window, operand 0, single buffered']
    %8 = vsyncpa [#allocation3], 0
    %9 = vsyncpa [#allocation6], 0
    %10 = vsyncpa [#allocation4], 0
    // Predicated region
    $region2: #{tpu_custom_call.1} parent=1 // pred_check
      _
    $region3: #{tpu_custom_call.1} parent=1 // pred_check_branch
      %12 = sbr.rel (0) target = $region5
    $region4: #{tpu_custom_call.1} parent=1 // pred_region
      %s14 = ssub.s32 256, 256
      %15 = vsyncadd [#allocation3], %s14
      %s16 = sshll.u32 [#allocation2], 4
      %s17 = int_to_ptr.vmem [resolvable:$true] %s16
      %22 = dma.hbm_to_vmem [thread:$0]  %s0, 256, %s17, [#allocation3], 128, 128, 8
    $region5: #{tpu_custom_call.1} parent=1 // pred_fallthru
      _
    // Predicated region
    $region6: #{tpu_custom_call.1} parent=1 // pred_check
      _
    $region7: #{tpu_custom_call.1} parent=1 // pred_check_branch
      %24 = sbr.rel (0) target = $region9
    $region8: #{tpu_custom_call.1} parent=1 // pred_region
      %s26 = ssub.s32 256, 256
      %27 = vsyncadd [#allocation6], %s26
      %s28 = sshll.u32 [#allocation5], 4
      %s29 = int_to_ptr.vmem [resolvable:$true] %s28
      %34 = dma.hbm_to_vmem [thread:$0]  %s1, 256, %s29, [#allocation6], 128, 128, 8
    $region9: #{tpu_custom_call.1} parent=1 // pred_fallthru
      _
    // Predicated region
    $region10: #{tpu_custom_call.1} parent=1 // pred_check
      _
    $region11: #{tpu_custom_call.1} parent=1 // pred_check_branch
      %36 = sbr.rel (0) target = $region13
    $region12: #{tpu_custom_call.1} parent=1 // pred_region
      %s38 = ssub.s32 256, 256
      %39 = vsyncadd [#allocation6], %s38
      %s40 = sshll.u32 [#allocation7], 4
      %s41 = int_to_ptr.vmem [resolvable:$true] %s40
      %46 = dma.hbm_to_vmem [thread:$0]  %s2, 256, %s41, [#allocation6], 128, 128, 8
    $region13: #{tpu_custom_call.1} parent=1 // pred_fallthru
      _
    // Predicated region
    $region14: #{tpu_custom_call.1} parent=1 // pred_check
      _
    $region15: #{tpu_custom_call.1} parent=1 // pred_check_branch
      %48 = sbr.rel (0) target = $region17
    $region16: #{tpu_custom_call.1} parent=1 // pred_region
      %49 = dma.done [#allocation3], 256
    $region17: #{tpu_custom_call.1} parent=1 // pred_fallthru
      _
    // Predicated region
    $region18: #{tpu_custom_call.1} parent=1 // pred_check
      _
    $region19: #{tpu_custom_call.1} parent=1 // pred_check_branch
      %51 = sbr.rel (0) target = $region21
    $region20: #{tpu_custom_call.1} parent=1 // pred_region
      %52 = dma.done [#allocation6], 256
    $region21: #{tpu_custom_call.1} parent=1 // pred_fallthru
      _
    // Predicated region
    $region22: #{tpu_custom_call.1} parent=1 // pred_check
      _
    $region23: #{tpu_custom_call.1} parent=1 // pred_check_branch
      %54 = sbr.rel (0) target = $region25
    $region24: #{tpu_custom_call.1} parent=1 // pred_region
      %55 = dma.done [#allocation6], 256
    $region25: #{tpu_custom_call.1} parent=1 // pred_fallthru
      _
    %v56 = vld [vmem:[#allocation2] sm:$0xff]
    %v57 = vld [vmem:[#allocation2 + $0x8] sm:$0xff]
    %v58 = vld [vmem:[#allocation5] sm:$0xff]
    %v59 = vld [vmem:[#allocation5 + $0x8] sm:$0xff]
    %v60 = vmul.f32 %v56, %v58
    %v61 = vmul.f32 %v57, %v59
    %v62 = vld [vmem:[#allocation7] sm:$0xff]
    %v63 = vld [vmem:[#allocation7 + $0x8] sm:$0xff]
    %v64 = vmul.f32 %v60, %v62
    %v65 = vmul.f32 %v61, %v63
    %66 = vst [vmem:[#allocation8] sm:$0xff] %v64
    %67 = vst [vmem:[#allocation8 + $0x8] sm:$0xff] %v65
    // Predicated region
    $region26: #{tpu_custom_call.1} parent=1 // pred_check
      _
    $region27: #{tpu_custom_call.1} parent=1 // pred_check_branch
      %69 = sbr.rel (0) target = $region29
    $region28: #{tpu_custom_call.1} parent=1 // pred_region
      %s71 = ssub.s32 256, 256
      %72 = vsyncadd [#allocation4], %s71
      %s73 = sshll.u32 [#allocation8], 4
      %s74 = int_to_ptr.vmem [resolvable:$true] %s73
      %79 = dma.vmem_to_hbm [thread:$0]  %s74, 256, %s3, [#allocation4], 128, 128, 8
    $region29: #{tpu_custom_call.1} parent=1 // pred_fallthru
      _
    // Predicated region
    $region30: #{tpu_custom_call.1} parent=1 // pred_check
      _
    $region31: #{tpu_custom_call.1} parent=1 // pred_check_branch
      %81 = sbr.rel (0) target = $region33
    $region32: #{tpu_custom_call.1} parent=1 // pred_region
      %82 = dma.done [#allocation4], 256
    $region33: #{tpu_custom_call.1} parent=1 // pred_fallthru
      _
    %83 = vsyncpa [#allocation3], 1
    %84 = vsyncpa [#allocation6], 1
    %85 = vsyncpa [#allocation4], 1

</llo_original>
